<compile_context>
chip_gen: v6e
topology: v6e:2x2x1
jax: 0.10.0
libtpu: 0.0.40
codegen_flags: <defaults>
</compile_context>

<pallas_src>
import functools

import jax
import jax.numpy as jnp
from jax.experimental import pallas as pl
from jax.experimental.pallas import tpu as pltpu


def _round_up(x, m):
    return ((x + m - 1) // m) * m


def _cdiv(a, b):
    return (a + b - 1) // b


def _distill_kl_tile_kernel(ys_ref, yt_ref, out_ref, *, inv_T, tile_b,
                            batch_size, mask_rows):
    """One (tile_b, C) tile of student/teacher logits -> (1, 128) partial KL sum."""
    ys = ys_ref[...].astype(jnp.float32)
    yt = yt_ref[...].astype(jnp.float32)

    # Row maxima on the raw logits (max(y/T) == max(y)/T for T > 0); the 1/T
    # scale is applied once after the shift (inside the exps / on row scalars).
    ys_max = jnp.max(ys, axis=1, keepdims=True)
    yt_max = jnp.max(yt, axis=1, keepdims=True)

    # Student: only the partition Z_s is needed (because sum_c p_t == 1).
    z_s = jnp.sum(jnp.exp((ys - ys_max) * inv_T), axis=1, keepdims=True)

    # Teacher: unnormalized softmax numerator and partition.
    e_t = jnp.exp((yt - yt_max) * inv_T)
    z_t = jnp.sum(e_t, axis=1, keepdims=True)

    # KL per row, with yt_sh - ys_sh = inv_T * ((yt - ys) + (ys_max - yt_max)):
    #   KL_row = inv_T/z_t * [ sum_c e_t*(yt - ys) + (ys_max - yt_max)*z_t ]
    #            + log(z_s / z_t)
    row_dot = (jnp.sum(e_t * (yt - ys), axis=1, keepdims=True)
               + (ys_max - yt_max) * z_t)
    r_t = pl.reciprocal(z_t, approx=False)           # per-row only; exact
    row_kl = inv_T * row_dot * r_t + jnp.log(z_s * r_t)   # single fused log

    if mask_rows:
        # Ragged last batch tile: rows past the true batch hold stale buffer
        # contents; zero their contribution (jnp.where is a select, so any
        # NaN/Inf produced from garbage rows is discarded).
        row0 = pl.program_id(0) * tile_b
        rows = row0 + jax.lax.broadcasted_iota(jnp.int32, (tile_b, 1), 0)
        row_kl = jnp.where(rows < batch_size, row_kl, 0.0)

    # Lane-dense (1, 128) partial store; wrapper reads column 0.
    tile_sum = jnp.sum(row_kl, axis=0, keepdims=True)      # (1, 1)
    out_ref[...] = jnp.broadcast_to(tile_sum, (1, 128))


def distill_kl(y_s, y_t, T):
    """JAX/Pallas equivalent of DistillKL_(T).forward(y_s, y_t). Returns scalar f32."""
    assert y_s.shape == y_t.shape and y_s.ndim == 2
    B, C = y_s.shape

    # ---- per-chip VMEM sizing ------------------------------------------------
    try:
        phys_vmem = int(pltpu.get_tpu_info().vmem_capacity_bytes)
    except Exception:
        phys_vmem = 64 * 1024 * 1024          # v7x per-core physical (smallest)
    # v7x: 48 MiB scoped; v5e/v6e: ~96 MiB (well above their 16/32 MiB defaults).
    vmem_limit = min((phys_vmem * 3) // 4, 100 * 1024 * 1024)

    # ---- batch tile size -----------------------------------------------------
    # Budget: 2 inputs x 2 pipeline buffers (input dtype) + ~4 full-width f32
    # intermediates materialized by the kernel body.
    itemsize = jnp.dtype(y_s.dtype).itemsize
    bytes_per_row = C * (4 * itemsize + 4 * 4)
    budget = vmem_limit - (2 << 20)
    tile_b = budget // bytes_per_row
    tile_b = int(max(8, min(8192, (tile_b // 8) * 8)))
    tile_b = min(tile_b, _round_up(B, 8))

    # v7x megacore: ensure the "parallel" batch axis has >= 2 roughly balanced
    # tiles so both TensorCores get work (no-op / harmless on v5e/v6e).
    if _cdiv(B, tile_b) < 2 and B >= 16:
        tile_b = _round_up(_cdiv(B, 2), 8)

    num_tiles = _cdiv(B, tile_b)
    mask_rows = (B % tile_b) != 0

    kernel = functools.partial(
        _distill_kl_tile_kernel,
        inv_T=1.0 / float(T),
        tile_b=tile_b,
        batch_size=B,
        mask_rows=mask_rows,
    )

    partials = pl.pallas_call(
        kernel,
        out_shape=jax.ShapeDtypeStruct((num_tiles, 128), jnp.float32),
        grid_spec=pltpu.PrefetchScalarGridSpec(
            num_scalar_prefetch=0,
            grid=(num_tiles,),
            in_specs=[
                # Class axis = full array dim (no lane padding / no pad copy).
                pl.BlockSpec((tile_b, C), lambda i: (i, 0)),
                pl.BlockSpec((tile_b, C), lambda i: (i, 0)),
            ],
            out_specs=pl.BlockSpec((1, 128), lambda i: (i, 0)),
        ),
        compiler_params=pltpu.CompilerParams(
            dimension_semantics=("parallel",),
            vmem_limit_bytes=int(vmem_limit),
        ),
    )(y_s, y_t)

    # TODO(synk): for vocab-scale C that doesn't fit 8 rows in VMEM, also tile
    # the class axis (reduction axis last in the grid) with an online logsumexp.
    return jnp.sum(partials[:, 0]) * (float(T) * float(T)) / float(B)


def _reference(y_s, y_t, T):
    # Pure-JAX reference for sanity checking.
    log_p_s = jax.nn.log_softmax(y_s.astype(jnp.float32) / T, axis=1)
    p_t = jax.nn.softmax(y_t.astype(jnp.float32) / T, axis=1)
    log_p_t = jax.nn.log_softmax(y_t.astype(jnp.float32) / T, axis=1)
    return jnp.sum(p_t * (log_p_t - log_p_s)) * T * T / y_s.shape[0]


if __name__ == "__main__":
    key = jax.random.PRNGKey(0)
    k1, k2 = jax.random.split(key)
    B, C = 8, 32          # small logits: batch=8, num_classes=32
    T = 4.0               # distillation temperature

    y_s = jax.random.normal(k1, (B, C), dtype=jnp.float32)   # student logits
    y_t = jax.random.normal(k2, (B, C), dtype=jnp.float32)   # teacher logits

    loss = distill_kl(y_s, y_t, T)
    loss = jax.block_until_ready(loss)

    ref = _reference(y_s, y_t, T)
    assert jnp.allclose(loss, ref, rtol=1e-4, atol=1e-6), (loss, ref)

    print("KERNEL_OK")
</pallas_src>

<mosaic_0001>
module attributes {stable_mosaic.version = 11 : i64} {
  func.func @_distill_kl_tile_kernel(%arg0: i32, %arg1: memref<8x32xf32, #tpu.memory_space<vmem>>, %arg2: memref<8x32xf32, #tpu.memory_space<vmem>>, %arg3: memref<1x128xf32, #tpu.memory_space<vmem>>) attributes {dimension_semantics = [#tpu.dimension_semantics<parallel>], iteration_bounds = array<i64: 1>, scalar_prefetch = 0 : i64, scratch_operands = 0 : i64, tpu.core_type = #tpu.core_type<tc>, window_params = [{transform_indices = @transform_0, window_bounds = array<i64: 8, 32>}, {transform_indices = @transform_1, window_bounds = array<i64: 8, 32>}, {transform_indices = @transform_2, window_bounds = array<i64: 1, 128>}]} {
    %c0 = arith.constant 0 : index
    %c0_0 = arith.constant 0 : index
    %0 = vector.load %arg1[%c0, %c0_0] : memref<8x32xf32, #tpu.memory_space<vmem>>, vector<8x32xf32>
    %c0_1 = arith.constant 0 : index
    %c0_2 = arith.constant 0 : index
    %1 = vector.load %arg2[%c0_1, %c0_2] : memref<8x32xf32, #tpu.memory_space<vmem>>, vector<8x32xf32>
    %cst = arith.constant dense<0xFF800000> : vector<8xf32>
    %2 = vector.multi_reduction <maximumf>, %0, %cst [1] : vector<8x32xf32> to vector<8xf32>
    %3 = vector.shape_cast %2 : vector<8xf32> to vector<8x1xf32>
    %cst_3 = arith.constant dense<0xFF800000> : vector<8xf32>
    %4 = vector.multi_reduction <maximumf>, %1, %cst_3 [1] : vector<8x32xf32> to vector<8xf32>
    %5 = vector.shape_cast %4 : vector<8xf32> to vector<8x1xf32>
    %6 = vector.broadcast %3 : vector<8x1xf32> to vector<8x32xf32>
    %7 = arith.subf %0, %6 : vector<8x32xf32>
    %cst_4 = arith.constant 2.500000e-01 : f32
    %8 = vector.broadcast %cst_4 : f32 to vector<8x32xf32>
    %9 = arith.mulf %7, %8 : vector<8x32xf32>
    %10 = math.exp %9 : vector<8x32xf32>
    %cst_5 = arith.constant dense<0.000000e+00> : vector<8xf32>
    %11 = vector.multi_reduction <add>, %10, %cst_5 [1] : vector<8x32xf32> to vector<8xf32>
    %12 = vector.shape_cast %11 : vector<8xf32> to vector<8x1xf32>
    %13 = vector.broadcast %5 : vector<8x1xf32> to vector<8x32xf32>
    %14 = arith.subf %1, %13 : vector<8x32xf32>
    %cst_6 = arith.constant 2.500000e-01 : f32
    %15 = vector.broadcast %cst_6 : f32 to vector<8x32xf32>
    %16 = arith.mulf %14, %15 : vector<8x32xf32>
    %17 = math.exp %16 : vector<8x32xf32>
    %cst_7 = arith.constant dense<0.000000e+00> : vector<8xf32>
    %18 = vector.multi_reduction <add>, %17, %cst_7 [1] : vector<8x32xf32> to vector<8xf32>
    %19 = vector.shape_cast %18 : vector<8xf32> to vector<8x1xf32>
    %20 = arith.subf %1, %0 : vector<8x32xf32>
    %21 = arith.mulf %17, %20 : vector<8x32xf32>
    %cst_8 = arith.constant dense<0.000000e+00> : vector<8xf32>
    %22 = vector.multi_reduction <add>, %21, %cst_8 [1] : vector<8x32xf32> to vector<8xf32>
    %23 = vector.shape_cast %22 : vector<8xf32> to vector<8x1xf32>
    %24 = arith.subf %3, %5 : vector<8x1xf32>
    %25 = arith.mulf %24, %19 : vector<8x1xf32>
    %26 = arith.addf %23, %25 : vector<8x1xf32>
    %27 = tpu.reciprocal %19 : vector<8x1xf32> -> vector<8x1xf32>
    %cst_9 = arith.constant 2.500000e-01 : f32
    %28 = vector.broadcast %cst_9 : f32 to vector<8x1xf32>
    %29 = arith.mulf %28, %26 : vector<8x1xf32>
    %30 = arith.mulf %29, %27 : vector<8x1xf32>
    %31 = arith.mulf %12, %27 : vector<8x1xf32>
    %32 = math.log %31 : vector<8x1xf32>
    %33 = arith.addf %30, %32 : vector<8x1xf32>
    %cst_10 = arith.constant dense<0.000000e+00> : vector<1xf32>
    %34 = vector.multi_reduction <add>, %33, %cst_10 [0] : vector<8x1xf32> to vector<1xf32>
    %35 = vector.shape_cast %34 : vector<1xf32> to vector<1x1xf32>
    %36 = vector.shape_cast %35 : vector<1x1xf32> to vector<1x1xf32>
    %37 = vector.broadcast %36 : vector<1x1xf32> to vector<1x128xf32>
    %c0_11 = arith.constant 0 : index
    %c0_12 = arith.constant 0 : index
    %38 = vector.load %arg3[%c0_11, %c0_12] : memref<1x128xf32, #tpu.memory_space<vmem>>, vector<1x128xf32>
    tpu.vector_store %arg3[%c0_11, %c0_12], %37 {strides = array<i32>} : memref<1x128xf32, #tpu.memory_space<vmem>>, vector<1x128xf32>,
    return
  }
  func.func @transform_0(%arg0: i32) -> (i32, i32) {
    %c0_i32 = arith.constant 0 : i32
    %c0_i32_0 = arith.constant 0 : i32
    return %arg0, %c0_i32 : i32, i32
  }
  func.func @transform_1(%arg0: i32) -> (i32, i32) {
    %c0_i32 = arith.constant 0 : i32
    %c0_i32_0 = arith.constant 0 : i32
    return %arg0, %c0_i32 : i32, i32
  }
  func.func @transform_2(%arg0: i32) -> (i32, i32) {
    %c0_i32 = arith.constant 0 : i32
    %c0_i32_0 = arith.constant 0 : i32
    return %arg0, %c0_i32 : i32, i32
  }
}

</mosaic_0001>

<llo_original>
// kernel: tpu_custom_call.1
$region0: #{tpu_custom_call.1}
  #allocation0 [shape = 'u32[]', space=smem, size = 0x4, offset = 0x4, fixed_abs, tag = 'smem constant byte address 0x4 - core index']
  #allocation1 [shape = 'u32[144,128]{1,0:T(1,128)}', space=vmem, size = 0x12000, scoped, tag = 'internal scratch']
  %s0 = inlined_call_operand.hbm [shape: f32[8,32], index: 0, kind: input, shape index: {}]
  %s1 = inlined_call_operand.hbm [shape: f32[8,32], index: 1, kind: input, shape index: {}]
  %s2 = inlined_call_operand.hbm [shape: f32[1,128], index: 2, kind: output, shape index: {}]
  %s3 = sld [smem:[#allocation0]]
  $region26: #{tpu_custom_call.1} parent=0
    _
  %s5 = ssub.s32 1, %s3
  %s6 = scalar_select 0, %s5, %s3
  $region1: #{tpu_custom_call.1} parent=0
    #allocation2 [shape = 'u8[4096]{0}', space=vmem, size = 0x1000, scoped, tag = 'input window, operand 0, single buffered']
    #allocation3 [shape = 's32[1]{0}', space=sflag, size = 0x4, scoped, tag = 'scoped memory for tpu_custom_call.1']
    #allocation4 [shape = 's32[1]{0}', space=sflag, size = 0x4, scoped, tag = 'scoped memory for tpu_custom_call.1']
    #allocation5 [shape = 'u8[4096]{0}', space=vmem, size = 0x1000, scoped, tag = 'input window, operand 1, single buffered']
    #allocation6 [shape = 's32[1]{0}', space=sflag, size = 0x4, scoped, tag = 'scoped memory for tpu_custom_call.1']
    #allocation7 [shape = 'u8[512]{0}', space=vmem, size = 0x400, scoped, tag = 'output window, operand 0, single buffered']
    %7 = vsyncpa [#allocation3], 0
    %8 = vsyncpa [#allocation6], 0
    %9 = vsyncpa [#allocation4], 0
    // Predicated region
    $region2: #{tpu_custom_call.1} parent=1 // pred_check
      _
    $region3: #{tpu_custom_call.1} parent=1 // pred_check_branch
      %11 = sbr.rel (0) target = $region5
    $region4: #{tpu_custom_call.1} parent=1 // pred_region
      %s13 = ssub.s32 128, 128
      %14 = vsyncadd [#allocation3], %s13
      %s16 = sshll.u32 [#allocation2], 4
      %s17 = int_to_ptr.vmem [resolvable:$true] %s16
      %19 = dma.hbm_to_vmem [thread:$0]  %s0, 128, %s17, [#allocation3]
    $region5: #{tpu_custom_call.1} parent=1 // pred_fallthru
      _
    // Predicated region
    $region6: #{tpu_custom_call.1} parent=1 // pred_check
      _
    $region7: #{tpu_custom_call.1} parent=1 // pred_check_branch
      %21 = sbr.rel (0) target = $region9
    $region8: #{tpu_custom_call.1} parent=1 // pred_region
      %s23 = ssub.s32 128, 128
      %24 = vsyncadd [#allocation6], %s23
      %s26 = sshll.u32 [#allocation5], 4
      %s27 = int_to_ptr.vmem [resolvable:$true] %s26
      %29 = dma.hbm_to_vmem [thread:$0]  %s1, 128, %s27, [#allocation6]
    $region9: #{tpu_custom_call.1} parent=1 // pred_fallthru
      _
    // Predicated region
    $region10: #{tpu_custom_call.1} parent=1 // pred_check
      _
    $region11: #{tpu_custom_call.1} parent=1 // pred_check_branch
      %31 = sbr.rel (0) target = $region13
    $region12: #{tpu_custom_call.1} parent=1 // pred_region
      %32 = dma.done [#allocation3], 128
    $region13: #{tpu_custom_call.1} parent=1 // pred_fallthru
      _
    // Predicated region
    $region14: #{tpu_custom_call.1} parent=1 // pred_check
      _
    $region15: #{tpu_custom_call.1} parent=1 // pred_check_branch
      %34 = sbr.rel (0) target = $region17
    $region16: #{tpu_custom_call.1} parent=1 // pred_region
      %35 = dma.done [#allocation6], 128
    $region17: #{tpu_custom_call.1} parent=1 // pred_fallthru
      _
    %v36 = vld [vmem:[#allocation2] sm:$0xff]
    %v37 = vld [vmem:[#allocation5] sm:$0xff]
    %vm38 = vcmask 261120
    %v39 = vsel %vm38, %v36, -inf
    %40 = vmax.xlane.f32.xlu0 %v39
    %v41 = vpop.xlane.xlu0 %40
    %v42 = vsel %vm38, %v37, -inf
    %43 = vmax.xlane.f32.xlu0 %v42
    %v44 = vpop.xlane.xlu0 %43
    %v45 = vsub.f32 %v36, %v41
    %v46 = vmul.f32 %v45, 0.25
    %v47 = vmul.f32 %v46, 1.442695
    %v48 = vpow.pop %v47
    %v49 = vsel %vm38, %v48, 0.0
    %50 = vadd.xlane.f32.xlu0 %v49
    %v51 = vpop.xlane.xlu0 %50
    %v52 = vsub.f32 %v37, %v44
    %v53 = vmul.f32 %v52, 0.25
    %v54 = vmul.f32 %v53, 1.442695
    %v55 = vpow.pop %v54
    %v56 = vsel %vm38, %v55, 0.0
    %57 = vadd.xlane.f32.xlu0 %v56
    %v58 = vpop.xlane.xlu0 %57
    %v59 = vsub.f32 %v37, %v36
    %v60 = vmul.f32 %v55, %v59
    %v61 = vsel %vm38, %v60, 0.0
    %62 = vadd.xlane.f32.xlu0 %v61
    %v63 = vpop.xlane.xlu0 %62
    %v64 = vsub.f32 %v41, %v44
    %v65 = vmul.f32 %v64, %v58
    %v66 = vadd.f32 %v63, %v65
    %v67 = vrcp.pop %v58
    %v68 = vmul.f32 %v66, 0.25
    %v69 = vmul.f32 %v68, %v67
    %v70 = vmul.f32 %v51, %v67
    %v71 = vlog2.pop %v70
    %v72 = vmul.f32 %v71, 0.6931472
    %v73 = vadd.f32 %v69, %v72
    %v74 = vrot.slane %v73, 4
    %v75 = vadd.f32 %v73, %v74
    %v76 = vrot.slane %v75, 2
    %v77 = vadd.f32 %v75, %v76
    %v78 = vrot.slane %v77, 1
    %v79 = vadd.f32 %v77, %v78
    %80 = vst [vmem:[#allocation7] sm:$0x1] %v79
    // Predicated region
    $region18: #{tpu_custom_call.1} parent=1 // pred_check
      _
    $region19: #{tpu_custom_call.1} parent=1 // pred_check_branch
      %82 = sbr.rel (0) target = $region21
    $region20: #{tpu_custom_call.1} parent=1 // pred_region
      %s84 = ssub.s32 16, 16
      %85 = vsyncadd [#allocation4], %s84
      %s87 = sshll.u32 [#allocation7], 4
      %s88 = int_to_ptr.vmem [resolvable:$true] %s87
      %90 = dma.vmem_to_hbm [thread:$0]  %s88, 16, %s2, [#allocation4]
    $region21: #{tpu_custom_call.1} parent=1 // pred_fallthru
      _
    // Predicated region
    $region22: #{tpu_custom_call.1} parent=1 // pred_check
      _
    $region23: #{tpu_custom_call.1} parent=1 // pred_check_branch
      %92 = sbr.rel (0) target = $region25
    $region24: #{tpu_custom_call.1} parent=1 // pred_region
      %93 = dma.done [#allocation4], 16
    $region25: #{tpu_custom_call.1} parent=1 // pred_fallthru
      _
    %94 = vsyncpa [#allocation3], 1
    %95 = vsyncpa [#allocation6], 1
    %96 = vsyncpa [#allocation4], 1

</llo_original>
